<compile_context>
chip_gen: v5e
topology: v5e:2x2
jax: 0.10.0
libtpu: 0.0.40
codegen_flags: <defaults>
</compile_context>

<pallas_src>
import functools

import jax
import jax.numpy as jnp
from jax.experimental import pallas as pl
from jax.experimental.pallas import tpu as pltpu

_EPS = 1e-5


def _round_up(v, m):
    return (v + m - 1) // m * m


def _cdiv(a, b):
    return -(-a // b)


# ---------------------------------------------------------------------------
# Kernel body.  grid = (M tiles, K tiles); K streams the weight over HBM->VMEM.
# ---------------------------------------------------------------------------
def _linear_seq_encoder_kernel(x_ref, gin_ref, bin_ref, w_ref, b_ref,
                               gout_ref, bout_ref, o_ref, xn_ref, acc_ref,
                               *, d_in, d_out, tk):
    k = pl.program_id(1)
    nk = pl.num_programs(1)

    # ---- k == 0: input LayerNorm on the fully-resident row block.
    #      Two-pass variance (mean-subtract first) in f32; pad lanes masked.
    #      Result is stored ONCE, already cast to the weight dtype. ----
    @pl.when(k == 0)
    def _():
        x = x_ref[...].astype(jnp.float32)                       # (TM, d_in_p)
        d_in_p = x.shape[-1]
        inv_n = 1.0 / float(d_in)                                # true d_in
        mu = jnp.sum(x, axis=-1, keepdims=True) * inv_n          # pads are zero
        xc = x - mu
        if d_in_p != d_in:                                       # mask pad lanes
            lane = jax.lax.broadcasted_iota(jnp.int32, (1, d_in_p), 1)
            xc = jnp.where(lane < d_in, xc, 0.0)
        var = jnp.sum(xc * xc, axis=-1, keepdims=True) * inv_n   # biased (torch)
        xn = xc * jax.lax.rsqrt(var + _EPS)
        xn = xn * gin_ref[...].astype(jnp.float32) + bin_ref[...].astype(jnp.float32)
        xn_ref[...] = xn.astype(xn_ref.dtype)                    # cast once
        acc_ref[...] = jnp.zeros_like(acc_ref)

    # ---- streamed matmul: k-th slice of normalized x × k-th weight tile ----
    start = pl.multiple_of(k * tk, tk)
    acc_ref[...] += jnp.dot(xn_ref[:, pl.ds(start, tk)], w_ref[...],
                            preferred_element_type=jnp.float32)

    # ---- last k: bias + output LayerNorm (two-pass variance) + store ----
    @pl.when(k == nk - 1)
    def _():
        y = acc_ref[...] + b_ref[...].astype(jnp.float32)        # (TM, d_out_p)
        d_out_p = y.shape[-1]
        inv_n = 1.0 / float(d_out)                               # true d_out
        mu = jnp.sum(y, axis=-1, keepdims=True) * inv_n          # pads are zero
        yc = y - mu
        if d_out_p != d_out:
            lane = jax.lax.broadcasted_iota(jnp.int32, (1, d_out_p), 1)
            yc = jnp.where(lane < d_out, yc, 0.0)
        var = jnp.sum(yc * yc, axis=-1, keepdims=True) * inv_n
        yn = yc * jax.lax.rsqrt(var + _EPS)
        yn = yn * gout_ref[...].astype(jnp.float32) + bout_ref[...].astype(jnp.float32)
        o_ref[...] = yn.astype(o_ref.dtype)


# ---------------------------------------------------------------------------
# One-time parameter preparation (padding / optional bf16 down-cast).
# ---------------------------------------------------------------------------
def prepare_params(params, *, weight_dtype=None):
    """Pad parameters to lane-dense shapes ONCE (and optionally cast W to a
    streaming dtype such as bf16).  Keeping this out of the per-call wrapper
    removes a full extra HBM read+write of the weight per forward call."""
    w = params["w"]
    d_in, d_out = w.shape
    d_in_p = _round_up(d_in, 128)
    d_out_p = _round_up(d_out, 128)
    wd = jnp.dtype(weight_dtype) if weight_dtype is not None else w.dtype
    return {
        "w": jnp.pad(w.astype(wd), ((0, d_in_p - d_in), (0, d_out_p - d_out))),
        "b": jnp.pad(params["b"], (0, d_out_p - d_out)).reshape(1, d_out_p),
        "gamma_in": jnp.pad(params["gamma_in"], (0, d_in_p - d_in)).reshape(1, d_in_p),
        "beta_in": jnp.pad(params["beta_in"], (0, d_in_p - d_in)).reshape(1, d_in_p),
        "gamma_out": jnp.pad(params["gamma_out"], (0, d_out_p - d_out)).reshape(1, d_out_p),
        "beta_out": jnp.pad(params["beta_out"], (0, d_out_p - d_out)).reshape(1, d_out_p),
        "d_in": d_in,
        "d_out": d_out,
    }


def _chip_budgets():
    """(tile-footprint budget, vmem_limit cap) per chip generation."""
    cap = None
    try:
        cap = getattr(pltpu.get_tpu_info(), "vmem_capacity_bytes", None)
    except Exception:
        cap = None
    if cap is None:
        cap = 64 << 20                       # conservative default (v7x per-TC)
    if cap >= (96 << 20):                    # v5e / v6e: 128 MiB physical VMEM
        return 92 << 20, 100 << 20
    return 44 << 20, 56 << 20                # v7x: 64 MiB per TensorCore


# ---------------------------------------------------------------------------
# Wrapper.
# ---------------------------------------------------------------------------
def linear_seq_encoder(x, prepared, out_len, out_dim, *, tm_max=256, tk_cap=None):
    """x: (B, in_len, in_dim) -> (B, out_len, out_dim). `prepared` from prepare_params."""
    B, L, D = x.shape
    d_in, d_out = L * D, out_len * out_dim
    assert prepared["d_in"] == d_in and prepared["d_out"] == d_out
    w = prepared["w"]
    d_in_p, d_out_p = w.shape

    x_item = jnp.dtype(x.dtype).itemsize
    w_item = jnp.dtype(w.dtype).itemsize
    out_item = x_item
    budget, limit_cap = _chip_budgets()

    def footprint(tm, tk):
        return (2 * tm * d_in_p * x_item            # x block (2 pipeline bufs)
                + tm * d_in_p * w_item              # xn scratch (w.dtype)
                + 2 * tk * d_out_p * w_item         # streamed weight (2 bufs)
                + tm * d_out_p * 4                  # f32 accumulator
                + 2 * tm * d_out_p * out_item       # output block (2 bufs)
                + 2 * 8 * d_in_p * 4 * 2            # gamma_in / beta_in rows
                + 2 * 8 * d_out_p * 4 * 3)          # bias / gamma_out / beta_out

    # -- tm: whole batch in ONE M tile when VMEM allows (W streamed from HBM
    #    exactly once); otherwise balance tiles so there is no nearly-empty
    #    trailing M tile that wastes a full weight pass. --
    tm = _round_up(B, 8)
    if footprint(tm, 128) > budget:
        n_m = max(2, _cdiv(B, tm_max))
        while True:
            tm = _round_up(_cdiv(B, n_m), 8)
            if footprint(tm, 128) <= budget or tm <= 8:
                break
            n_m += 1
    b_p = _round_up(B, tm)

    # -- tk: largest 128-multiple divisor of d_in_p fitting the per-chip budget
    #    (keeps 2-deep weight buffering alive; no per-call K re-padding). --
    n128 = d_in_p // 128
    tk = 128
    for m in range(n128, 0, -1):
        if n128 % m:
            continue
        cand = m * 128
        if tk_cap is not None and cand > tk_cap:
            continue
        if footprint(tm, cand) <= budget:
            tk = cand
            break

    grid = (b_p // tm, d_in_p // tk)
    vmem_limit = min(max(int(footprint(tm, tk) * 5 // 4) + (2 << 20), 32 << 20),
                     limit_cap)

    # Only the activation is padded per call (cheap relative to W traffic).
    x2 = x.reshape(B, d_in)
    if b_p != B or d_in_p != d_in:
        x2 = jnp.pad(x2, ((0, b_p - B), (0, d_in_p - d_in)))

    kernel = functools.partial(_linear_seq_encoder_kernel,
                               d_in=d_in, d_out=d_out, tk=tk)

    out = pl.pallas_call(
        kernel,
        out_shape=jax.ShapeDtypeStruct((b_p, d_out_p), x.dtype),
        grid_spec=pltpu.PrefetchScalarGridSpec(
            num_scalar_prefetch=0,
            grid=grid,
            in_specs=[
                pl.BlockSpec((tm, d_in_p), lambda mi, ki: (mi, 0)),   # x (resident over K)
                pl.BlockSpec((1, d_in_p), lambda mi, ki: (0, 0)),     # gamma_in
                pl.BlockSpec((1, d_in_p), lambda mi, ki: (0, 0)),     # beta_in
                pl.BlockSpec((tk, d_out_p), lambda mi, ki: (ki, 0)),  # W (streamed over K)
                pl.BlockSpec((1, d_out_p), lambda mi, ki: (0, 0)),    # bias
                pl.BlockSpec((1, d_out_p), lambda mi, ki: (0, 0)),    # gamma_out
                pl.BlockSpec((1, d_out_p), lambda mi, ki: (0, 0)),    # beta_out
            ],
            out_specs=pl.BlockSpec((tm, d_out_p), lambda mi, ki: (mi, 0)),
            scratch_shapes=[
                pltpu.VMEM((tm, d_in_p), w.dtype),       # normalized x (w.dtype)
                pltpu.VMEM((tm, d_out_p), jnp.float32),  # matmul accumulator
            ],
        ),
        compiler_params=pltpu.CompilerParams(
            dimension_semantics=("parallel", "arbitrary"),
            vmem_limit_bytes=vmem_limit,
        ),
    )(x2, prepared["gamma_in"], prepared["beta_in"], w,
      prepared["b"], prepared["gamma_out"], prepared["beta_out"])

    return out[:B, :d_out].reshape(B, out_len, out_dim)


# ---------------------------------------------------------------------------
# Reference + init (torch-equivalent defaults).
# ---------------------------------------------------------------------------
def _reference(x, params, out_len, out_dim):
    B, L, D = x.shape
    d_in, d_out = L * D, out_len * out_dim
    h = x.reshape(B, d_in).astype(jnp.float32)

    def ln(v, g, b):
        m = jnp.mean(v, axis=-1, keepdims=True)
        s = jnp.mean((v - m) ** 2, axis=-1, keepdims=True)
        return (v - m) / jnp.sqrt(s + _EPS) * g + b

    h = ln(h, params["gamma_in"], params["beta_in"])
    h = h @ params["w"] + params["b"]
    h = ln(h, params["gamma_out"], params["beta_out"])
    return h.reshape(B, out_len, out_dim)


def init_params(key, in_dim, in_len, out_dim, out_len, dtype=jnp.float32):
    d_in, d_out = in_dim * in_len, out_dim * out_len
    kw, kb = jax.random.split(key)
    bound = 1.0 / jnp.sqrt(d_in)
    # torch nn.Linear default init: U(-1/sqrt(fan_in), 1/sqrt(fan_in))
    w = jax.random.uniform(kw, (d_in, d_out), dtype, -bound, bound)
    b = jax.random.uniform(kb, (d_out,), dtype, -bound, bound)
    return {
        "w": w,
        "b": b,
        # torch LayerNorm default init: gamma=1, beta=0
        "gamma_in": jnp.ones((d_in,), dtype),
        "beta_in": jnp.zeros((d_in,), dtype),
        "gamma_out": jnp.ones((d_out,), dtype),
        "beta_out": jnp.zeros((d_out,), dtype),
    }


if __name__ == "__main__":
    key = jax.random.PRNGKey(0)

    configs = [
        # (B, in_len, in_dim, out_len, out_dim, weight_dtype, tk_cap, tol)
        (2, 8, 32, 8, 32, None, None, 2e-4),           # single-tile path (grid (1,1))
        (2, 8, 96, 8, 40, None, None, 2e-4),           # lane padding on d_in / d_out
        (4, 16, 96, 8, 64, None, 512, 2e-4),           # forced K streaming (nk = 3)
        (2, 8, 96, 8, 40, jnp.bfloat16, None, 1e-1),   # bf16 weight-stream path
    ]
    for i, (B, in_len, in_dim, out_len, out_dim, wdt, tk_cap, tol) in enumerate(configs):
        kx, kp, key = jax.random.split(key, 3)
        x = jax.random.normal(kx, (B, in_len, in_dim), jnp.float32)
        params = init_params(kp, in_dim, in_len, out_dim, out_len)
        prepared = prepare_params(params, weight_dtype=wdt)   # one-time padding

        out = jax.block_until_ready(
            linear_seq_encoder(x, prepared, out_len, out_dim, tk_cap=tk_cap))
        ref = _reference(x, params, out_len, out_dim)

        assert out.shape == (B, out_len, out_dim)
        assert jnp.allclose(out, ref, atol=tol, rtol=tol), \
            f"mismatch vs reference (config {i})"

    print("KERNEL_OK")
</pallas_src>

<mosaic_0001>
module attributes {stable_mosaic.version = 11 : i64} {
  func.func @_linear_seq_encoder_kernel(%arg0: i32, %arg1: i32, %arg2: memref<8x256xf32, #tpu.memory_space<vmem>>, %arg3: memref<1x256xf32, #tpu.memory_space<vmem>>, %arg4: memref<1x256xf32, #tpu.memory_space<vmem>>, %arg5: memref<256x256xf32, #tpu.memory_space<vmem>>, %arg6: memref<1x256xf32, #tpu.memory_space<vmem>>, %arg7: memref<1x256xf32, #tpu.memory_space<vmem>>, %arg8: memref<1x256xf32, #tpu.memory_space<vmem>>, %arg9: memref<8x256xf32, #tpu.memory_space<vmem>>, %arg10: memref<8x256xf32, #tpu.memory_space<vmem>>, %arg11: memref<8x256xf32, #tpu.memory_space<vmem>>) attributes {dimension_semantics = [#tpu.dimension_semantics<parallel>, #tpu.dimension_semantics<arbitrary>], iteration_bounds = array<i64: 1, 1>, scalar_prefetch = 0 : i64, scratch_operands = 2 : i64, tpu.core_type = #tpu.core_type<tc>, window_params = [{transform_indices = @transform_0, window_bounds = array<i64: 8, 256>}, {pipeline_mode = #tpu.pipeline_mode<synchronous>, transform_indices = @transform_1, window_bounds = array<i64: 1, 256>}, {pipeline_mode = #tpu.pipeline_mode<synchronous>, transform_indices = @transform_2, window_bounds = array<i64: 1, 256>}, {transform_indices = @transform_3, window_bounds = array<i64: 256, 256>}, {pipeline_mode = #tpu.pipeline_mode<synchronous>, transform_indices = @transform_4, window_bounds = array<i64: 1, 256>}, {pipeline_mode = #tpu.pipeline_mode<synchronous>, transform_indices = @transform_5, window_bounds = array<i64: 1, 256>}, {pipeline_mode = #tpu.pipeline_mode<synchronous>, transform_indices = @transform_6, window_bounds = array<i64: 1, 256>}, {transform_indices = @transform_7, window_bounds = array<i64: 8, 256>}]} {
    %c0_i32 = arith.constant 0 : i32
    %0 = arith.cmpi eq, %arg1, %c0_i32 : i32
    %1 = arith.extui %0 : i1 to i32
    %c0_i32_0 = arith.constant 0 : i32
    %2 = arith.cmpi ne, %1, %c0_i32_0 : i32
    scf.if %2 {
      %c0_9 = arith.constant 0 : index
      %c0_10 = arith.constant 0 : index
      %15 = vector.load %arg2[%c0_9, %c0_10] : memref<8x256xf32, #tpu.memory_space<vmem>>, vector<8x256xf32>
      %cst_11 = arith.constant dense<0.000000e+00> : vector<8xf32>
      %16 = vector.multi_reduction <add>, %15, %cst_11 [1] : vector<8x256xf32> to vector<8xf32>
      %17 = vector.shape_cast %16 : vector<8xf32> to vector<8x1xf32>
      %cst_12 = arith.constant 3.906250e-03 : f32
      %18 = vector.broadcast %cst_12 : f32 to vector<8x1xf32>
      %19 = arith.mulf %17, %18 : vector<8x1xf32>
      %20 = vector.broadcast %19 : vector<8x1xf32> to vector<8x256xf32>
      %21 = arith.subf %15, %20 : vector<8x256xf32>
      %22 = arith.mulf %21, %21 : vector<8x256xf32>
      %cst_13 = arith.constant dense<0.000000e+00> : vector<8xf32>
      %23 = vector.multi_reduction <add>, %22, %cst_13 [1] : vector<8x256xf32> to vector<8xf32>
      %24 = vector.shape_cast %23 : vector<8xf32> to vector<8x1xf32>
      %cst_14 = arith.constant 3.906250e-03 : f32
      %25 = vector.broadcast %cst_14 : f32 to vector<8x1xf32>
      %26 = arith.mulf %24, %25 : vector<8x1xf32>
      %cst_15 = arith.constant 9.99999974E-6 : f32
      %27 = vector.broadcast %cst_15 : f32 to vector<8x1xf32>
      %28 = arith.addf %26, %27 : vector<8x1xf32>
      %29 = math.rsqrt %28 : vector<8x1xf32>
      %30 = vector.broadcast %29 : vector<8x1xf32> to vector<8x256xf32>
      %31 = arith.mulf %21, %30 : vector<8x256xf32>
      %c0_16 = arith.constant 0 : index
      %c0_17 = arith.constant 0 : index
      %32 = vector.load %arg3[%c0_16, %c0_17] : memref<1x256xf32, #tpu.memory_space<vmem>>, vector<1x256xf32>
      %33 = vector.broadcast %32 : vector<1x256xf32> to vector<8x256xf32>
      %34 = arith.mulf %31, %33 : vector<8x256xf32>
      %c0_18 = arith.constant 0 : index
      %c0_19 = arith.constant 0 : index
      %35 = vector.load %arg4[%c0_18, %c0_19] : memref<1x256xf32, #tpu.memory_space<vmem>>, vector<1x256xf32>
      %36 = vector.broadcast %35 : vector<1x256xf32> to vector<8x256xf32>
      %37 = arith.addf %34, %36 : vector<8x256xf32>
      %c0_20 = arith.constant 0 : index
      %c0_21 = arith.constant 0 : index
      %38 = vector.load %arg10[%c0_20, %c0_21] : memref<8x256xf32, #tpu.memory_space<vmem>>, vector<8x256xf32>
      tpu.vector_store %arg10[%c0_20, %c0_21], %37 {strides = array<i32>} : memref<8x256xf32, #tpu.memory_space<vmem>>, vector<8x256xf32>,
      %cst_22 = arith.constant 0.000000e+00 : f32
      %39 = vector.broadcast %cst_22 : f32 to vector<8x256xf32>
      %c0_23 = arith.constant 0 : index
      %c0_24 = arith.constant 0 : index
      %40 = vector.load %arg11[%c0_23, %c0_24] : memref<8x256xf32, #tpu.memory_space<vmem>>, vector<8x256xf32>
      tpu.vector_store %arg11[%c0_23, %c0_24], %39 {strides = array<i32>} : memref<8x256xf32, #tpu.memory_space<vmem>>, vector<8x256xf32>,
    } else {
    }
    %c256_i32 = arith.constant 256 : i32
    %3 = arith.muli %arg1, %c256_i32 : i32
    %4 = tpu.assume_multiple %3, 256 : i32
    %c0 = arith.constant 0 : index
    %c0_1 = arith.constant 0 : index
    %5 = vector.load %arg11[%c0, %c0_1] : memref<8x256xf32, #tpu.memory_space<vmem>>, vector<8x256xf32>
    %c0_2 = arith.constant 0 : index
    %6 = arith.index_cast %4 : i32 to index
    %7 = vector.load %arg10[%c0_2, %6] : memref<8x256xf32, #tpu.memory_space<vmem>>, vector<8x256xf32>
    %c0_3 = arith.constant 0 : index
    %c0_4 = arith.constant 0 : index
    %8 = vector.load %arg5[%c0_3, %c0_4] : memref<256x256xf32, #tpu.memory_space<vmem>>, vector<256x256xf32>
    %cst = arith.constant dense<0.000000e+00> : vector<8x256xf32>
    %9 = tpu.matmul %7, %8, %cst {dimension_numbers = #tpu.dot_dimension_numbers<[1], [0], [0], [1], [0, 0, 1, 1], [], []>} : vector<8x256xf32>, vector<256x256xf32>, vector<8x256xf32> -> vector<8x256xf32>
    %10 = arith.addf %5, %9 : vector<8x256xf32>
    %c0_5 = arith.constant 0 : index
    %c0_6 = arith.constant 0 : index
    %11 = vector.load %arg11[%c0_5, %c0_6] : memref<8x256xf32, #tpu.memory_space<vmem>>, vector<8x256xf32>
    tpu.vector_store %arg11[%c0_5, %c0_6], %10 {strides = array<i32>} : memref<8x256xf32, #tpu.memory_space<vmem>>, vector<8x256xf32>,
    %c0_i32_7 = arith.constant 0 : i32
    %12 = arith.cmpi eq, %arg1, %c0_i32_7 : i32
    %13 = arith.extui %12 : i1 to i32
    %c0_i32_8 = arith.constant 0 : i32
    %14 = arith.cmpi ne, %13, %c0_i32_8 : i32
    scf.if %14 {
      %c0_9 = arith.constant 0 : index
      %c0_10 = arith.constant 0 : index
      %15 = vector.load %arg11[%c0_9, %c0_10] : memref<8x256xf32, #tpu.memory_space<vmem>>, vector<8x256xf32>
      %c0_11 = arith.constant 0 : index
      %c0_12 = arith.constant 0 : index
      %16 = vector.load %arg6[%c0_11, %c0_12] : memref<1x256xf32, #tpu.memory_space<vmem>>, vector<1x256xf32>
      %17 = vector.broadcast %16 : vector<1x256xf32> to vector<8x256xf32>
      %18 = arith.addf %15, %17 : vector<8x256xf32>
      %cst_13 = arith.constant dense<0.000000e+00> : vector<8xf32>
      %19 = vector.multi_reduction <add>, %18, %cst_13 [1] : vector<8x256xf32> to vector<8xf32>
      %20 = vector.shape_cast %19 : vector<8xf32> to vector<8x1xf32>
      %cst_14 = arith.constant 3.906250e-03 : f32
      %21 = vector.broadcast %cst_14 : f32 to vector<8x1xf32>
      %22 = arith.mulf %20, %21 : vector<8x1xf32>
      %23 = vector.broadcast %22 : vector<8x1xf32> to vector<8x256xf32>
      %24 = arith.subf %18, %23 : vector<8x256xf32>
      %25 = arith.mulf %24, %24 : vector<8x256xf32>
      %cst_15 = arith.constant dense<0.000000e+00> : vector<8xf32>
      %26 = vector.multi_reduction <add>, %25, %cst_15 [1] : vector<8x256xf32> to vector<8xf32>
      %27 = vector.shape_cast %26 : vector<8xf32> to vector<8x1xf32>
      %cst_16 = arith.constant 3.906250e-03 : f32
      %28 = vector.broadcast %cst_16 : f32 to vector<8x1xf32>
      %29 = arith.mulf %27, %28 : vector<8x1xf32>
      %cst_17 = arith.constant 9.99999974E-6 : f32
      %30 = vector.broadcast %cst_17 : f32 to vector<8x1xf32>
      %31 = arith.addf %29, %30 : vector<8x1xf32>
      %32 = math.rsqrt %31 : vector<8x1xf32>
      %33 = vector.broadcast %32 : vector<8x1xf32> to vector<8x256xf32>
      %34 = arith.mulf %24, %33 : vector<8x256xf32>
      %c0_18 = arith.constant 0 : index
      %c0_19 = arith.constant 0 : index
      %35 = vector.load %arg7[%c0_18, %c0_19] : memref<1x256xf32, #tpu.memory_space<vmem>>, vector<1x256xf32>
      %36 = vector.broadcast %35 : vector<1x256xf32> to vector<8x256xf32>
      %37 = arith.mulf %34, %36 : vector<8x256xf32>
      %c0_20 = arith.constant 0 : index
      %c0_21 = arith.constant 0 : index
      %38 = vector.load %arg8[%c0_20, %c0_21] : memref<1x256xf32, #tpu.memory_space<vmem>>, vector<1x256xf32>
      %39 = vector.broadcast %38 : vector<1x256xf32> to vector<8x256xf32>
      %40 = arith.addf %37, %39 : vector<8x256xf32>
      %c0_22 = arith.constant 0 : index
      %c0_23 = arith.constant 0 : index
      %41 = vector.load %arg9[%c0_22, %c0_23] : memref<8x256xf32, #tpu.memory_space<vmem>>, vector<8x256xf32>
      tpu.vector_store %arg9[%c0_22, %c0_23], %40 {strides = array<i32>} : memref<8x256xf32, #tpu.memory_space<vmem>>, vector<8x256xf32>,
    } else {
    }
    return
  }
  func.func @transform_0(%arg0: i32, %arg1: i32) -> (i32, i32) {
    %c0_i32 = arith.constant 0 : i32
    %c0_i32_0 = arith.constant 0 : i32
    return %arg0, %c0_i32 : i32, i32
  }
  func.func @transform_1(%arg0: i32, %arg1: i32) -> (i32, i32) {
    %c0_i32 = arith.constant 0 : i32
    %c0_i32_0 = arith.constant 0 : i32
    %c0_i32_1 = arith.constant 0 : i32
    return %c0_i32, %c0_i32_0 : i32, i32
  }
  func.func @transform_2(%arg0: i32, %arg1: i32) -> (i32, i32) {
    %c0_i32 = arith.constant 0 : i32
    %c0_i32_0 = arith.constant 0 : i32
    %c0_i32_1 = arith.constant 0 : i32
    return %c0_i32, %c0_i32_0 : i32, i32
  }
  func.func @transform_3(%arg0: i32, %arg1: i32) -> (i32, i32) {
    %c0_i32 = arith.constant 0 : i32
    %c0_i32_0 = arith.constant 0 : i32
    return %arg1, %c0_i32 : i32, i32
  }
  func.func @transform_4(%arg0: i32, %arg1: i32) -> (i32, i32) {
    %c0_i32 = arith.constant 0 : i32
    %c0_i32_0 = arith.constant 0 : i32
    %c0_i32_1 = arith.constant 0 : i32
    return %c0_i32, %c0_i32_0 : i32, i32
  }
  func.func @transform_5(%arg0: i32, %arg1: i32) -> (i32, i32) {
    %c0_i32 = arith.constant 0 : i32
    %c0_i32_0 = arith.constant 0 : i32
    %c0_i32_1 = arith.constant 0 : i32
    return %c0_i32, %c0_i32_0 : i32, i32
  }
  func.func @transform_6(%arg0: i32, %arg1: i32) -> (i32, i32) {
    %c0_i32 = arith.constant 0 : i32
    %c0_i32_0 = arith.constant 0 : i32
    %c0_i32_1 = arith.constant 0 : i32
    return %c0_i32, %c0_i32_0 : i32, i32
  }
  func.func @transform_7(%arg0: i32, %arg1: i32) -> (i32, i32) {
    %c0_i32 = arith.constant 0 : i32
    %c0_i32_0 = arith.constant 0 : i32
    return %arg0, %c0_i32 : i32, i32
  }
}

</mosaic_0001>

<llo_original>
// kernel: tpu_custom_call.1
$region0: #{tpu_custom_call.1}
  #allocation0 [shape = 'u32[]', space=smem, size = 0x4, offset = 0x4, fixed_abs, tag = 'smem constant byte address 0x4 - core index']
  #allocation1 [shape = 'u32[72,128]{1,0:T(1,128)}', space=vmem, size = 0x9000, scoped, tag = 'internal scratch']
  #allocation2 [shape = 'f32[8,256]{1,0:T(8,128)}', space=vmem, size = 0x2000, scoped, tag = 'scratch operand']
  #allocation3 [shape = 'f32[8,256]{1,0:T(8,128)}', space=vmem, size = 0x2000, scoped, tag = 'scratch operand']
  %s0 = inlined_call_operand.hbm [shape: f32[8,256], index: 0, kind: input, shape index: {}]
  %s1 = inlined_call_operand.hbm [shape: f32[1,256], index: 1, kind: input, shape index: {}]
  %s2 = inlined_call_operand.hbm [shape: f32[1,256], index: 2, kind: input, shape index: {}]
  %s3 = inlined_call_operand.hbm [shape: f32[256,256], index: 3, kind: input, shape index: {}]
  %s4 = inlined_call_operand.vmem [shape: f32[1,256], index: 4, kind: input, shape index: {}]
  %s5 = inlined_call_operand.vmem [shape: f32[1,256], index: 5, kind: input, shape index: {}]
  %s6 = inlined_call_operand.hbm [shape: f32[1,256], index: 6, kind: input, shape index: {}]
  %s7 = inlined_call_operand.hbm [shape: f32[8,256], index: 7, kind: output, shape index: {}]
  %s8 = sld [smem:[#allocation0]]
  $region66: #{tpu_custom_call.1} parent=0
    _
  %s10 = ssub.s32 1, %s8
  %s11 = scalar_select 0, %s10, %s8
  $region1: #{tpu_custom_call.1} parent=0
    #allocation4 [shape = 'u8[8192]{0}', space=vmem, size = 0x2000, scoped, tag = 'input window, operand 0, single buffered']
    #allocation5 [shape = 's32[1]{0}', space=sflag, size = 0x4, scoped, tag = 'scoped memory for tpu_custom_call.1']
    #allocation6 [shape = 's32[1]{0}', space=sflag, size = 0x4, scoped, tag = 'scoped memory for tpu_custom_call.1']
    #allocation7 [shape = 'u8[1024]{0}', space=vmem, size = 0x400, scoped, tag = 'input window, operand 1, single buffered']
    #allocation8 [shape = 's32[1]{0}', space=sflag, size = 0x4, scoped, tag = 'scoped memory for tpu_custom_call.1']
    #allocation9 [shape = 'u8[1024]{0}', space=vmem, size = 0x400, scoped, tag = 'input window, operand 2, single buffered']
    #allocation10 [shape = 'u8[262144]{0}', space=vmem, size = 0x40000, scoped, tag = 'input window, operand 3, single buffered']
    #allocation11 [shape = 's32[1]{0}', space=sflag, size = 0x4, scoped, tag = 'scoped memory for tpu_custom_call.1']
    #allocation12 [shape = 'u8[1024]{0}', space=vmem, size = 0x400, scoped, tag = 'input window, operand 6, single buffered']
    #allocation13 [shape = 'u8[8192]{0}', space=vmem, size = 0x2000, scoped, tag = 'output window, operand 0, single buffered']
    %12 = vsyncpa [#allocation5], 0
    %13 = vsyncpa [#allocation8], 0
    %14 = vsyncpa [#allocation11], 0
    %15 = vsyncpa [#allocation6], 0
    // Predicated region
    $region2: #{tpu_custom_call.1} parent=1 // pred_check
      _
    $region3: #{tpu_custom_call.1} parent=1 // pred_check_branch
      %17 = sbr.rel (0) target = $region5
    $region4: #{tpu_custom_call.1} parent=1 // pred_region
      %19 = vsyncadd [#allocation5], 0
      %s21 = sshll.u32 %s0, 4
      %s22 = int_to_ptr.hbm [resolvable:$true] %s21
      %s23 = sshll.u32 [#allocation4], 4
      %s24 = int_to_ptr.vmem [resolvable:$true] %s23
      %26 = dma.hbm_to_vmem [thread:$0]  %s22, 256, %s24, [#allocation5]
    $region5: #{tpu_custom_call.1} parent=1 // pred_fallthru
      _
    // Predicated region
    $region6: #{tpu_custom_call.1} parent=1 // pred_check
      _
    $region7: #{tpu_custom_call.1} parent=1 // pred_check_branch
      %28 = sbr.rel (0) target = $region9
    $region8: #{tpu_custom_call.1} parent=1 // pred_region
      %30 = vsyncadd [#allocation8], 0
      %s32 = sshll.u32 %s1, 4
      %s33 = int_to_ptr.hbm [resolvable:$true] %s32
      %s34 = sshll.u32 [#allocation7], 4
      %s35 = int_to_ptr.vmem [resolvable:$true] %s34
      %37 = dma.hbm_to_vmem [thread:$0]  %s33, 32, %s35, [#allocation8]
    $region9: #{tpu_custom_call.1} parent=1 // pred_fallthru
      _
    // Predicated region
    $region10: #{tpu_custom_call.1} parent=1 // pred_check
      _
    $region11: #{tpu_custom_call.1} parent=1 // pred_check_branch
      %39 = sbr.rel (0) target = $region13
    $region12: #{tpu_custom_call.1} parent=1 // pred_region
      %41 = vsyncadd [#allocation8], 0
      %s43 = sshll.u32 %s2, 4
      %s44 = int_to_ptr.hbm [resolvable:$true] %s43
      %s45 = sshll.u32 [#allocation9], 4
      %s46 = int_to_ptr.vmem [resolvable:$true] %s45
      %48 = dma.hbm_to_vmem [thread:$0]  %s44, 32, %s46, [#allocation8]
    $region13: #{tpu_custom_call.1} parent=1 // pred_fallthru
      _
    // Predicated region
    $region14: #{tpu_custom_call.1} parent=1 // pred_check
      _
    $region15: #{tpu_custom_call.1} parent=1 // pred_check_branch
      %50 = sbr.rel (0) target = $region17
    $region16: #{tpu_custom_call.1} parent=1 // pred_region
      %52 = vsyncadd [#allocation11], 0
      %s53 = sshll.u32 %s3, 4
      %s54 = int_to_ptr.hbm [resolvable:$true] %s53
      %s55 = sshll.u32 [#allocation10], 4
      %s56 = int_to_ptr.vmem [resolvable:$true] %s55
      %61 = dma.hbm_to_vmem [thread:$0]  %s54, 8192, %s56, [#allocation11], 256, 256, 16
    $region17: #{tpu_custom_call.1} parent=1 // pred_fallthru
      _
    // Predicated region
    $region18: #{tpu_custom_call.1} parent=1 // pred_check
      _
    $region19: #{tpu_custom_call.1} parent=1 // pred_check_branch
      %63 = sbr.rel (0) target = $region21
    $region20: #{tpu_custom_call.1} parent=1 // pred_region
      _
    $region21: #{tpu_custom_call.1} parent=1 // pred_fallthru
      _
    // Predicated region
    $region22: #{tpu_custom_call.1} parent=1 // pred_check
      _
    $region23: #{tpu_custom_call.1} parent=1 // pred_check_branch
      %65 = sbr.rel (0) target = $region25
    $region24: #{tpu_custom_call.1} parent=1 // pred_region
      _
    $region25: #{tpu_custom_call.1} parent=1 // pred_fallthru
      _
    // Predicated region
    $region26: #{tpu_custom_call.1} parent=1 // pred_check
      _
    $region27: #{tpu_custom_call.1} parent=1 // pred_check_branch
      %67 = sbr.rel (0) target = $region29
    $region28: #{tpu_custom_call.1} parent=1 // pred_region
      %69 = vsyncadd [#allocation11], 0
      %s71 = sshll.u32 %s6, 4
      %s72 = int_to_ptr.hbm [resolvable:$true] %s71
      %s73 = sshll.u32 [#allocation12], 4
      %s74 = int_to_ptr.vmem [resolvable:$true] %s73
      %76 = dma.hbm_to_vmem [thread:$0]  %s72, 32, %s74, [#allocation11]
    $region29: #{tpu_custom_call.1} parent=1 // pred_fallthru
      _
    // Predicated region
    $region30: #{tpu_custom_call.1} parent=1 // pred_check
      _
    $region31: #{tpu_custom_call.1} parent=1 // pred_check_branch
      %78 = sbr.rel (0) target = $region33
    $region32: #{tpu_custom_call.1} parent=1 // pred_region
      %80 = dma.done [#allocation5], 256
    $region33: #{tpu_custom_call.1} parent=1 // pred_fallthru
      _
    // Predicated region
    $region34: #{tpu_custom_call.1} parent=1 // pred_check
      _
    $region35: #{tpu_custom_call.1} parent=1 // pred_check_branch
      %82 = sbr.rel (0) target = $region37
    $region36: #{tpu_custom_call.1} parent=1 // pred_region
      %84 = dma.done [#allocation8], 32
    $region37: #{tpu_custom_call.1} parent=1 // pred_fallthru
      _
    // Predicated region
    $region38: #{tpu_custom_call.1} parent=1 // pred_check
      _
    $region39: #{tpu_custom_call.1} parent=1 // pred_check_branch
      %86 = sbr.rel (0) target = $region41
    $region40: #{tpu_custom_call.1} parent=1 // pred_region
      %88 = dma.done [#allocation8], 32
    $region41: #{tpu_custom_call.1} parent=1 // pred_fallthru
      _
    // Predicated region
    $region42: #{tpu_custom_call.1} parent=1 // pred_check
      _
    $region43: #{tpu_custom_call.1} parent=1 // pred_check_branch
      %90 = sbr.rel (0) target = $region45
    $region44: #{tpu_custom_call.1} parent=1 // pred_region
      %92 = dma.done [#allocation11], 8192
    $region45: #{tpu_custom_call.1} parent=1 // pred_fallthru
      _
    // Predicated region
    $region46: #{tpu_custom_call.1} parent=1 // pred_check
      _
    $region47: #{tpu_custom_call.1} parent=1 // pred_check_branch
      %94 = sbr.rel (0) target = $region49
    $region48: #{tpu_custom_call.1} parent=1 // pred_region
      %96 = dma.done [#allocation11], 32
    $region49: #{tpu_custom_call.1} parent=1 // pred_fallthru
      _
    %p97 = scmp.eq.s32.totalorder 0, 0
    // Predicated region
    $region50: #{tpu_custom_call.1} parent=1 // pred_check
      %p98 = pneg %p97
    $region51: #{tpu_custom_call.1} parent=1 // pred_check_branch
      %100 = sbr.rel (%p98) target = $region53
    $region52: #{tpu_custom_call.1} parent=1 // pred_region
      %v101 = vld [vmem:[#allocation4] sm:$0xff]
      %v102 = vld [vmem:[#allocation4 + $0x8] sm:$0xff]
      %v103 = vadd.f32 %v101, %v102
      %104 = vadd.xlane.f32.xlu0 %v103
      %v105 = vpop.xlane.xlu0 %104
      %v106 = vmul.f32 %v105, 0.00390625
      %v107 = vsub.f32 %v101, %v106
      %v108 = vsub.f32 %v102, %v106
      %v109 = vmul.f32 %v107, %v107
      %v110 = vmul.f32 %v108, %v108
      %v111 = vadd.f32 %v109, %v110
      %112 = vadd.xlane.f32.xlu0 %v111
      %v113 = vpop.xlane.xlu0 %112
      %v114 = vmul.f32 %v113, 0.00390625
      %v115 = vadd.f32 %v114, 1e-05
      %v116 = vrsqrt.pop %v115
      %v117 = vmul.f32 %v116, %v115
      %v118 = vmul.f32 %v117, %v116
      %v119 = vmul.f32 0.5, %v118
      %v120 = vsub.f32 1.5, %v119
      %v121 = vmul.f32 %v116, %v120
      %vm122 = vweird.f32 %v115
      %vm123 = vweird.f32 %v116
      %vm124 = vmor %vm122, %vm123
      %v125 = vsel %vm124, %v116, %v121
      %v126 = vmul.f32 %v107, %v125
      %v127 = vmul.f32 %v108, %v125
      %v128 = vld [vmem:[#allocation7] sm:$0x3]
      %v130 = vperm.slane %v128, 0
      %v131 = vperm.slane %v128, 1
      %v134 = vmul.f32 %v126, %v130
      %v135 = vmul.f32 %v127, %v131
      %v136 = vld [vmem:[#allocation9] sm:$0x3]
      %v138 = vperm.slane %v136, 0
      %v139 = vperm.slane %v136, 1
      %v142 = vadd.f32 %v134, %v138
      %v143 = vadd.f32 %v135, %v139
      %144 = vst [vmem:[#allocation2] sm:$0xff] %v142
      %145 = vst [vmem:[#allocation2 + $0x8] sm:$0xff] %v143
      %146 = vst [vmem:[#allocation3] sm:$0xff] 0.0
      %147 = vst [vmem:[#allocation3 + $0x8] sm:$0xff] 0.0
    $region53: #{tpu_custom_call.1} parent=1 // pred_fallthru
      _
    %s148 = smul.u32 0, 256
    %v149 = vld [vmem:[#allocation3] sm:$0xff]
    %v150 = vld [vmem:[#allocation3 + $0x8] sm:$0xff]
    %s151 = sshra.s32 %s148, 7
    %s152 = sand.u32 %s148, 127
    %s153 = smul.addr %s151, 8
    %s154 = scalar_lea.vmem [#allocation2], %s153
    %v155 = vld [vmem:[%s154] sm:$0xff]
    %v156 = vld [vmem:[%s154 + $0x8] sm:$0xff]
    %v157 = vld [vmem:[#allocation10] sm:$0xff]
    %v158 = vld [vmem:[#allocation10 + $0x8] sm:$0xff]
    %v159 = vld [vmem:[#allocation10 + $0x10] sm:$0xff]
    %v160 = vld [vmem:[#allocation10 + $0x18] sm:$0xff]
    %v161 = vld [vmem:[#allocation10 + $0x20] sm:$0xff]
    %v162 = vld [vmem:[#allocation10 + $0x28] sm:$0xff]
    %v163 = vld [vmem:[#allocation10 + $0x30] sm:$0xff]
    %v164 = vld [vmem:[#allocation10 + $0x38] sm:$0xff]
    %v165 = vld [vmem:[#allocation10 + $0x40] sm:$0xff]
    %v166 = vld [vmem:[#allocation10 + $0x48] sm:$0xff]
    %v167 = vld [vmem:[#allocation10 + $0x50] sm:$0xff]
    %v168 = vld [vmem:[#allocation10 + $0x58] sm:$0xff]
    %v169 = vld [vmem:[#allocation10 + $0x60] sm:$0xff]
    %v170 = vld [vmem:[#allocation10 + $0x68] sm:$0xff]
    %v171 = vld [vmem:[#allocation10 + $0x70] sm:$0xff]
    %v172 = vld [vmem:[#allocation10 + $0x78] sm:$0xff]
    %v173 = vld [vmem:[#allocation10 + $0x80] sm:$0xff]
    %v174 = vld [vmem:[#allocation10 + $0x88] sm:$0xff]
    %v175 = vld [vmem:[#allocation10 + $0x90] sm:$0xff]
    %v176 = vld [vmem:[#allocation10 + $0x98] sm:$0xff]
    %v177 = vld [vmem:[#allocation10 + $0xa0] sm:$0xff]
    %v178 = vld [vmem:[#allocation10 + $0xa8] sm:$0xff]
    %v179 = vld [vmem:[#allocation10 + $0xb0] sm:$0xff]
    %v180 = vld [vmem:[#allocation10 + $0xb8] sm:$0xff]
    %v181 = vld [vmem:[#allocation10 + $0xc0] sm:$0xff]
    %v182 = vld [vmem:[#allocation10 + $0xc8] sm:$0xff]
    %v183 = vld [vmem:[#allocation10 + $0xd0] sm:$0xff]
    %v184 = vld [vmem:[#allocation10 + $0xd8] sm:$0xff]
    %v185 = vld [vmem:[#allocation10 + $0xe0] sm:$0xff]
    %v186 = vld [vmem:[#allocation10 + $0xe8] sm:$0xff]
    %v187 = vld [vmem:[#allocation10 + $0xf0] sm:$0xff]
    %v188 = vld [vmem:[#allocation10 + $0xf8] sm:$0xff]
    %v189 = vld [vmem:[#allocation10 + $0x100] sm:$0xff]
    %v190 = vld [vmem:[#allocation10 + $0x108] sm:$0xff]
    %v191 = vld [vmem:[#allocation10 + $0x110] sm:$0xff]
    %v192 = vld [vmem:[#allocation10 + $0x118] sm:$0xff]
    %v193 = vld [vmem:[#allocation10 + $0x120] sm:$0xff]
    %v194 = vld [vmem:[#allocation10 + $0x128] sm:$0xff]
    %v195 = vld [vmem:[#allocation10 + $0x130] sm:$0xff]
    %v196 = vld [vmem:[#allocation10 + $0x138] sm:$0xff]
    %v197 = vld [vmem:[#allocation10 + $0x140] sm:$0xff]
    %v198 = vld [vmem:[#allocation10 + $0x148] sm:$0xff]
    %v199 = vld [vmem:[#allocation10 + $0x150] sm:$0xff]
    %v200 = vld [vmem:[#allocation10 + $0x158] sm:$0xff]
    %v201 = vld [vmem:[#allocation10 + $0x160] sm:$0xff]
    %v202 = vld [vmem:[#allocation10 + $0x168] sm:$0xff]
    %v203 = vld [vmem:[#allocation10 + $0x170] sm:$0xff]
    %v204 = vld [vmem:[#allocation10 + $0x178] sm:$0xff]
    %v205 = vld [vmem:[#allocation10 + $0x180] sm:$0xff]
    %v206 = vld [vmem:[#allocation10 + $0x188] sm:$0xff]
    %v207 = vld [vmem:[#allocation10 + $0x190] sm:$0xff]
    %v208 = vld [vmem:[#allocation10 + $0x198] sm:$0xff]
    %v209 = vld [vmem:[#allocation10 + $0x1a0] sm:$0xff]
    %v210 = vld [vmem:[#allocation10 + $0x1a8] sm:$0xff]
    %v211 = vld [vmem:[#allocation10 + $0x1b0] sm:$0xff]
    %v212 = vld [vmem:[#allocation10 + $0x1b8] sm:$0xff]
    %v213 = vld [vmem:[#allocation10 + $0x1c0] sm:$0xff]
    %v214 = vld [vmem:[#allocation10 + $0x1c8] sm:$0xff]
    %v215 = vld [vmem:[#allocation10 + $0x1d0] sm:$0xff]
    %v216 = vld [vmem:[#allocation10 + $0x1d8] sm:$0xff]
    %v217 = vld [vmem:[#allocation10 + $0x1e0] sm:$0xff]
    %v218 = vld [vmem:[#allocation10 + $0x1e8] sm:$0xff]
    %v219 = vld [vmem:[#allocation10 + $0x1f0] sm:$0xff]
    %v220 = vld [vmem:[#allocation10 + $0x1f8] sm:$0xff]
    %221 = vmatpush.msra.mxu0 %v187
    %222 = vmatpush.msra.mxu0 %v185
    %223 = vmatpush.msra.mxu0 %v183
    %224 = vmatpush.msra.mxu0 %v181
    %225 = vmatpush.msra.mxu0 %v179
    %226 = vmatpush.msra.mxu0 %v177
    %227 = vmatpush.msra.mxu0 %v175
    %228 = vmatpush.msra.mxu0 %v173
    %229 = vmatpush.msra.mxu0 %v171
    %230 = vmatpush.msra.mxu0 %v169
    %231 = vmatpush.msra.mxu0 %v167
    %232 = vmatpush.msra.mxu0 %v165
    %233 = vmatpush.msra.mxu0 %v163
    %234 = vmatpush.msra.mxu0 %v161
    %235 = vmatpush.msra.mxu0 %v159
    %236 = vmatpush.msra.mxu0 %v157
    %237 = vmatmul.f32.gmra.mxu0 %v155
    %v238 = vpop.f32.mrf.mxu0
    %v239 = vadd.f32 0.0, %v238
    %240 = vdwg.mxu0
    %241 = vmatpush.msra.mxu0 %v219
    %242 = vmatpush.msra.mxu0 %v217
    %243 = vmatpush.msra.mxu0 %v215
    %244 = vmatpush.msra.mxu0 %v213
    %245 = vmatpush.msra.mxu0 %v211
    %246 = vmatpush.msra.mxu0 %v209
    %247 = vmatpush.msra.mxu0 %v207
    %248 = vmatpush.msra.mxu0 %v205
    %249 = vmatpush.msra.mxu0 %v203
    %250 = vmatpush.msra.mxu0 %v201
    %251 = vmatpush.msra.mxu0 %v199
    %252 = vmatpush.msra.mxu0 %v197
    %253 = vmatpush.msra.mxu0 %v195
    %254 = vmatpush.msra.mxu0 %v193
    %255 = vmatpush.msra.mxu0 %v191
    %256 = vmatpush.msra.mxu0 %v189
    %257 = vmatmul.f32.gmra.mxu0 %v156
    %v258 = vpop.f32.mrf.mxu0
    %v259 = vadd.f32 %v239, %v258
    %260 = vdwg.mxu0
    %261 = vmatpush.msra.mxu0 %v188
    %262 = vmatpush.msra.mxu0 %v186
    %263 = vmatpush.msra.mxu0 %v184
    %264 = vmatpush.msra.mxu0 %v182
    %265 = vmatpush.msra.mxu0 %v180
    %266 = vmatpush.msra.mxu0 %v178
    %267 = vmatpush.msra.mxu0 %v176
    %268 = vmatpush.msra.mxu0 %v174
    %269 = vmatpush.msra.mxu0 %v172
    %270 = vmatpush.msra.mxu0 %v170
    %271 = vmatpush.msra.mxu0 %v168
    %272 = vmatpush.msra.mxu0 %v166
    %273 = vmatpush.msra.mxu0 %v164
    %274 = vmatpush.msra.mxu0 %v162
    %275 = vmatpush.msra.mxu0 %v160
    %276 = vmatpush.msra.mxu0 %v158
    %277 = vmatmul.f32.gmra.mxu0 %v155
    %v278 = vpop.f32.mrf.mxu0
    %v279 = vadd.f32 0.0, %v278
    %280 = vdwg.mxu0
    %281 = vmatpush.msra.mxu0 %v220
    %282 = vmatpush.msra.mxu0 %v218
    %283 = vmatpush.msra.mxu0 %v216
    %284 = vmatpush.msra.mxu0 %v214
    %285 = vmatpush.msra.mxu0 %v212
    %286 = vmatpush.msra.mxu0 %v210
    %287 = vmatpush.msra.mxu0 %v208
    %288 = vmatpush.msra.mxu0 %v206
    %289 = vmatpush.msra.mxu0 %v204
    %290 = vmatpush.msra.mxu0 %v202
    %291 = vmatpush.msra.mxu0 %v200
    %292 = vmatpush.msra.mxu0 %v198
    %293 = vmatpush.msra.mxu0 %v196
    %294 = vmatpush.msra.mxu0 %v194
    %295 = vmatpush.msra.mxu0 %v192
    %296 = vmatpush.msra.mxu0 %v190
    %297 = vmatmul.f32.gmra.mxu0 %v156
    %v298 = vpop.f32.mrf.mxu0
    %v299 = vadd.f32 %v279, %v298
    %300 = vdwg.mxu0
    %v301 = vadd.f32 %v149, %v259
    %v302 = vadd.f32 %v150, %v299
    %303 = vst [vmem:[#allocation3] sm:$0xff] %v301
    %304 = vst [vmem:[#allocation3 + $0x8] sm:$0xff] %v302
    // Predicated region
    $region54: #{tpu_custom_call.1} parent=1 // pred_check
      %p305 = pneg %p97
    $region55: #{tpu_custom_call.1} parent=1 // pred_check_branch
      %307 = sbr.rel (%p305) target = $region57
    $region56: #{tpu_custom_call.1} parent=1 // pred_region
      %v308 = vld [vmem:[#allocation3] sm:$0xff]
      %v309 = vld [vmem:[#allocation3 + $0x8] sm:$0xff]
      %v310 = vld [vmem:[%s4] sm:$0x3]
      %v312 = vperm.slane %v310, 0
      %v313 = vperm.slane %v310, 1
      %v316 = vadd.f32 %v308, %v312
      %v317 = vadd.f32 %v309, %v313
      %v318 = vadd.f32 %v316, %v317
      %319 = vadd.xlane.f32.xlu0 %v318
      %v320 = vpop.xlane.xlu0 %319
      %v321 = vmul.f32 %v320, 0.00390625
      %v322 = vsub.f32 %v316, %v321
      %v323 = vsub.f32 %v317, %v321
      %v324 = vmul.f32 %v322, %v322
      %v325 = vmul.f32 %v323, %v323
      %v326 = vadd.f32 %v324, %v325
      %327 = vadd.xlane.f32.xlu0 %v326
      %v328 = vpop.xlane.xlu0 %327
      %v329 = vmul.f32 %v328, 0.00390625
      %v330 = vadd.f32 %v329, 1e-05
      %v331 = vrsqrt.pop %v330
      %v332 = vmul.f32 %v331, %v330
      %v333 = vmul.f32 %v332, %v331
      %v334 = vmul.f32 0.5, %v333
      %v335 = vsub.f32 1.5, %v334
      %v336 = vmul.f32 %v331, %v335
      %vm337 = vweird.f32 %v330
      %vm338 = vweird.f32 %v331
      %vm339 = vmor %vm337, %vm338
      %v340 = vsel %vm339, %v331, %v336
      %v341 = vmul.f32 %v322, %v340
      %v342 = vmul.f32 %v323, %v340
      %v343 = vld [vmem:[%s5] sm:$0x3]
      %v345 = vperm.slane %v343, 0
      %v346 = vperm.slane %v343, 1
      %v349 = vmul.f32 %v341, %v345
      %v350 = vmul.f32 %v342, %v346
      %v351 = vld [vmem:[#allocation12] sm:$0x3]
      %v353 = vperm.slane %v351, 0
      %v354 = vperm.slane %v351, 1
      %v357 = vadd.f32 %v349, %v353
      %v358 = vadd.f32 %v350, %v354
      %359 = vst [vmem:[#allocation13] sm:$0xff] %v357
      %360 = vst [vmem:[#allocation13 + $0x8] sm:$0xff] %v358
    $region57: #{tpu_custom_call.1} parent=1 // pred_fallthru
      _
    // Predicated region
    $region58: #{tpu_custom_call.1} parent=1 // pred_check
      _
    $region59: #{tpu_custom_call.1} parent=1 // pred_check_branch
      %362 = sbr.rel (0) target = $region61
    $region60: #{tpu_custom_call.1} parent=1 // pred_region
      %364 = vsyncadd [#allocation6], 0
      %s366 = sshll.u32 [#allocation13], 4
      %s367 = int_to_ptr.vmem [resolvable:$true] %s366
      %s368 = sshll.u32 %s7, 4
      %s369 = int_to_ptr.hbm [resolvable:$true] %s368
      %371 = dma.vmem_to_hbm [thread:$0]  %s367, 256, %s369, [#allocation6]
    $region61: #{tpu_custom_call.1} parent=1 // pred_fallthru
      _
    // Predicated region
    $region62: #{tpu_custom_call.1} parent=1 // pred_check
      _
    $region63: #{tpu_custom_call.1} parent=1 // pred_check_branch
      %373 = sbr.rel (0) target = $region65
    $region64: #{tpu_custom_call.1} parent=1 // pred_region
      %375 = dma.done [#allocation6], 256
    $region65: #{tpu_custom_call.1} parent=1 // pred_fallthru
      _
    %376 = vsyncpa [#allocation5], 1
    %377 = vsyncpa [#allocation8], 1
    %378 = vsyncpa [#allocation11], 1
    %379 = vsyncpa [#allocation6], 1

</llo_original>
